<compile_context>
chip_gen: v7x
topology: tpu7x:2x2x1
jax: 0.10.0
libtpu: 0.0.40
codegen_flags: <defaults>
</compile_context>

<pallas_src>
import functools

import jax
import jax.numpy as jnp
from jax.experimental import pallas as pl
from jax.experimental.pallas import tpu as pltpu


def _stats_pool_kernel(x_ref, o_ref, sum_ref, sumsq_ref, *,
                       t_total: int, t_tile: int, needs_mask: bool,
                       floor: float, bessel: bool):
    # x_ref:   (Bb, Tt, Dt) input tile in VMEM
    # o_ref:   (Bb, 2, Dt)  output tile (resident across the T grid axis)
    # sum_ref, sumsq_ref: (Bb, Dt) f32 accumulators (VMEM scratch)
    ti = pl.program_id(2)

    @pl.when(ti == 0)
    def _init():
        sum_ref[...] = jnp.zeros_like(sum_ref)
        sumsq_ref[...] = jnp.zeros_like(sumsq_ref)

    x = x_ref[...].astype(jnp.float32)                     # (Bb, Tt, Dt)

    if needs_mask:
        # Ragged tail: zero out rows past the true T (jnp.where so any
        # garbage in the padded region, even NaN, cannot propagate).
        t_idx = jax.lax.broadcasted_iota(jnp.int32, x.shape, dimension=1)
        valid = (ti * t_tile + t_idx) < t_total
        x = jnp.where(valid, x, jnp.float32(0.0))

    sum_ref[...] += jnp.sum(x, axis=1)                     # (Bb, Dt)
    sumsq_ref[...] += jnp.sum(x * x, axis=1)               # (Bb, Dt)

    @pl.when(ti == pl.num_programs(2) - 1)
    def _finalize():
        t_f = jnp.float32(t_total)
        # Matches PyTorch: bessel=True with T == 1 divides by zero (inf/nan).
        denom = jnp.float32(t_total - 1 if bessel else t_total)
        mean = sum_ref[...] / t_f
        # sum((x - mean)^2) == sumsq - T * mean^2 ; clamp AFTER subtraction.
        numerator = sumsq_ref[...] - t_f * mean * mean
        stds = jnp.sqrt(jnp.maximum(numerator, jnp.float32(floor)) / denom)
        out = jnp.concatenate([mean[:, None, :], stds[:, None, :]], axis=1)
        o_ref[...] = out.astype(o_ref.dtype)               # single store


def _largest_divisor(n: int, candidates) -> int:
    for c in candidates:
        if c <= n and n % c == 0:
            return c
    return 1


def _min_time_step(itemsize: int) -> int:
    # Sublane packing: f32 -> 8 rows, bf16 -> 16, int8/fp8 -> 32.
    return {4: 8, 2: 16, 1: 32}.get(itemsize, 8)


def _vmem_config():
    """Generation-aware (per-input-buffer budget, vmem_limit_bytes)."""
    try:
        vmem_cap = int(pltpu.get_tpu_info().vmem_capacity_bytes)
    except Exception:  # pragma: no cover - conservative fallback
        vmem_cap = 128 << 20
    if vmem_cap <= (64 << 20):          # v7x-class: 64 MiB VMEM per core
        budget = 10 << 20               # 2x double-buffered ~= 20 MiB
        limit = 44 << 20
    else:                               # v5e / v6e: 128 MiB VMEM
        budget = 14 << 20               # 2x double-buffered ~= 28 MiB
        limit = 64 << 20
    return budget, min(limit, vmem_cap - (16 << 20))


def _pick_time_tile(t: int, max_tt: int, min_tt: int) -> int:
    if t <= min_tt:
        return t                        # full-T block (full-dim exemption)
    tt = min(max_tt, t)
    tt = max((tt // min_tt) * min_tt, min_tt)
    if tt >= t:
        return t
    return tt


def stats_pool(x: jax.Array, floor: float = 1e-10, bessel: bool = False,
               *, max_t_tile: int | None = None) -> jax.Array:
    """StatsPool forward: x (B, T, D) -> (B, 2*D) = [means | stds]."""
    b, t, d = x.shape
    itemsize = jnp.dtype(x.dtype).itemsize
    min_tt = _min_time_step(itemsize)
    budget_bytes, vmem_limit = _vmem_config()

    # ---- tile selection -------------------------------------------------
    bb = _largest_divisor(b, (8, 4, 2, 1))

    # Prefer the full feature width (contiguous HBM rows); only split D on
    # lane-aligned boundaries if even a minimal time tile would not fit.
    dt = d
    while (bb * min_tt * dt * itemsize > budget_bytes
           and dt % 2 == 0 and (dt // 2) % 128 == 0):
        dt //= 2

    # Guarantee >= 2 parallel blocks when cheap, so v7x uses both cores.
    if (b // bb) * (d // dt) == 1:
        if bb > 1 and bb % 2 == 0:
            bb //= 2
        elif dt % 256 == 0:
            dt //= 2

    max_tt = max(budget_bytes // (bb * dt * itemsize), min_tt)
    if max_t_tile is not None:
        max_tt = min(max_tt, max_t_tile)
    tt = _pick_time_tile(t, max_tt, min_tt)

    grid = (b // bb, d // dt, pl.cdiv(t, tt))
    needs_mask = (t % tt) != 0

    kernel = functools.partial(
        _stats_pool_kernel, t_total=t, t_tile=tt, needs_mask=needs_mask,
        floor=floor, bessel=bessel)

    cost = pl.CostEstimate(
        flops=3 * b * t * d,
        transcendentals=b * d,
        bytes_accessed=(b * t * d + 2 * b * d) * itemsize)

    out3 = pl.pallas_call(
        kernel,
        out_shape=jax.ShapeDtypeStruct((b, 2, d), x.dtype),
        grid_spec=pltpu.PrefetchScalarGridSpec(
            num_scalar_prefetch=0,
            grid=grid,
            in_specs=[pl.BlockSpec((bb, tt, dt), lambda bi, di, ti: (bi, ti, di))],
            out_specs=pl.BlockSpec((bb, 2, dt), lambda bi, di, ti: (bi, 0, di)),
            scratch_shapes=[pltpu.VMEM((bb, dt), jnp.float32),
                            pltpu.VMEM((bb, dt), jnp.float32)],
        ),
        compiler_params=pltpu.CompilerParams(
            dimension_semantics=("parallel", "parallel", "arbitrary"),
            vmem_limit_bytes=vmem_limit,
        ),
        cost_estimate=cost,
    )(x)

    # (B, 2, D) row-major == [means | stds] per row; free reshape to (B, 2*D).
    return out3.reshape(b, 2 * d)


def _reference_stats_pool(x, floor=1e-10, bessel=False):
    # Pure-JAX reference mirroring the PyTorch module.
    means = jnp.mean(x, axis=1)
    t = x.shape[1]
    if bessel:
        t = t - 1
    residuals = x - means[:, None, :]
    numerator = jnp.sum(residuals ** 2, axis=1)
    stds = jnp.sqrt(jnp.clip(numerator, min=floor) / t)
    return jnp.concatenate([means, stds], axis=1)


if __name__ == "__main__":
    key = jax.random.PRNGKey(0)

    # Small shape matching the module's (batch, t, features) convention.
    B, T, D = 2, 8, 32
    x = jax.random.normal(key, (B, T, D), dtype=jnp.float32)

    out = jax.block_until_ready(stats_pool(x, floor=1e-10, bessel=False))
    ref = _reference_stats_pool(x, floor=1e-10, bessel=False)
    assert out.shape == (B, 2 * D), out.shape
    assert jnp.allclose(out, ref, atol=1e-5, rtol=1e-5), "mismatch vs reference"

    # Bessel path.
    out_b = jax.block_until_ready(stats_pool(x, floor=1e-10, bessel=True))
    ref_b = _reference_stats_pool(x, floor=1e-10, bessel=True)
    assert jnp.allclose(out_b, ref_b, atol=1e-5, rtol=1e-5), "bessel mismatch"

    # Streamed multi-step T with a ragged tail (exercises cdiv + tail mask).
    B2, T2, D2 = 4, 37, 128
    x2 = jax.random.normal(jax.random.PRNGKey(1), (B2, T2, D2), dtype=jnp.float32)
    out2 = jax.block_until_ready(stats_pool(x2, max_t_tile=8))
    ref2 = _reference_stats_pool(x2)
    assert out2.shape == (B2, 2 * D2), out2.shape
    assert jnp.allclose(out2, ref2, atol=1e-5, rtol=1e-5), "ragged-T mismatch"

    # bf16 path (dtype-aware 16-row sublane step, f32 accumulation).
    x3 = jax.random.normal(jax.random.PRNGKey(2), (2, 64, 256), dtype=jnp.bfloat16)
    out3 = jax.block_until_ready(stats_pool(x3, max_t_tile=16))
    ref3 = _reference_stats_pool(x3.astype(jnp.float32))
    assert jnp.allclose(out3.astype(jnp.float32), ref3, atol=2e-2, rtol=2e-2), \
        "bf16 mismatch"

    print("KERNEL_OK")
</pallas_src>

<mosaic_0001>
module attributes {stable_mosaic.version = 11 : i64} {
  func.func @_stats_pool_kernel(%arg0: i32, %arg1: i32, %arg2: i32, %arg3: memref<1x8x32xf32, #tpu.memory_space<vmem>>, %arg4: memref<1x2x32xf32, #tpu.memory_space<vmem>>, %arg5: memref<1x32xf32, #tpu.memory_space<vmem>>, %arg6: memref<1x32xf32, #tpu.memory_space<vmem>>) attributes {dimension_semantics = [#tpu.dimension_semantics<parallel>, #tpu.dimension_semantics<parallel>, #tpu.dimension_semantics<arbitrary>], iteration_bounds = array<i64: 2, 1, 1>, scalar_prefetch = 0 : i64, scratch_operands = 2 : i64, tpu.core_type = #tpu.core_type<tc>, window_params = [{transform_indices = @transform_0, window_bounds = array<i64: 1, 8, 32>}, {transform_indices = @transform_1, window_bounds = array<i64: 1, 2, 32>}]} {
    %c0_i32 = arith.constant 0 : i32
    %0 = arith.cmpi eq, %arg2, %c0_i32 : i32
    %1 = arith.extui %0 : i1 to i32
    %c0_i32_0 = arith.constant 0 : i32
    %2 = arith.cmpi ne, %1, %c0_i32_0 : i32
    scf.if %2 {
      %cst_14 = arith.constant 0.000000e+00 : f32
      %16 = vector.broadcast %cst_14 : f32 to vector<1x32xf32>
      %c0_15 = arith.constant 0 : index
      %c0_16 = arith.constant 0 : index
      %17 = vector.load %arg5[%c0_15, %c0_16] : memref<1x32xf32, #tpu.memory_space<vmem>>, vector<1x32xf32>
      tpu.vector_store %arg5[%c0_15, %c0_16], %16 {strides = array<i32>} : memref<1x32xf32, #tpu.memory_space<vmem>>, vector<1x32xf32>,
      %cst_17 = arith.constant 0.000000e+00 : f32
      %18 = vector.broadcast %cst_17 : f32 to vector<1x32xf32>
      %c0_18 = arith.constant 0 : index
      %c0_19 = arith.constant 0 : index
      %19 = vector.load %arg6[%c0_18, %c0_19] : memref<1x32xf32, #tpu.memory_space<vmem>>, vector<1x32xf32>
      tpu.vector_store %arg6[%c0_18, %c0_19], %18 {strides = array<i32>} : memref<1x32xf32, #tpu.memory_space<vmem>>, vector<1x32xf32>,
    } else {
    }
    %c0 = arith.constant 0 : index
    %c0_1 = arith.constant 0 : index
    %c0_2 = arith.constant 0 : index
    %3 = vector.load %arg3[%c0, %c0_1, %c0_2] : memref<1x8x32xf32, #tpu.memory_space<vmem>>, vector<1x8x32xf32>
    %c0_3 = arith.constant 0 : index
    %c0_4 = arith.constant 0 : index
    %4 = vector.load %arg5[%c0_3, %c0_4] : memref<1x32xf32, #tpu.memory_space<vmem>>, vector<1x32xf32>
    %cst = arith.constant dense<0.000000e+00> : vector<1x32xf32>
    %5 = vector.multi_reduction <add>, %3, %cst [1] : vector<1x8x32xf32> to vector<1x32xf32>
    %6 = arith.addf %4, %5 : vector<1x32xf32>
    %c0_5 = arith.constant 0 : index
    %c0_6 = arith.constant 0 : index
    %7 = vector.load %arg5[%c0_5, %c0_6] : memref<1x32xf32, #tpu.memory_space<vmem>>, vector<1x32xf32>
    tpu.vector_store %arg5[%c0_5, %c0_6], %6 {strides = array<i32>} : memref<1x32xf32, #tpu.memory_space<vmem>>, vector<1x32xf32>,
    %c0_7 = arith.constant 0 : index
    %c0_8 = arith.constant 0 : index
    %8 = vector.load %arg6[%c0_7, %c0_8] : memref<1x32xf32, #tpu.memory_space<vmem>>, vector<1x32xf32>
    %9 = arith.mulf %3, %3 : vector<1x8x32xf32>
    %cst_9 = arith.constant dense<0.000000e+00> : vector<1x32xf32>
    %10 = vector.multi_reduction <add>, %9, %cst_9 [1] : vector<1x8x32xf32> to vector<1x32xf32>
    %11 = arith.addf %8, %10 : vector<1x32xf32>
    %c0_10 = arith.constant 0 : index
    %c0_11 = arith.constant 0 : index
    %12 = vector.load %arg6[%c0_10, %c0_11] : memref<1x32xf32, #tpu.memory_space<vmem>>, vector<1x32xf32>
    tpu.vector_store %arg6[%c0_10, %c0_11], %11 {strides = array<i32>} : memref<1x32xf32, #tpu.memory_space<vmem>>, vector<1x32xf32>,
    %c0_i32_12 = arith.constant 0 : i32
    %13 = arith.cmpi eq, %arg2, %c0_i32_12 : i32
    %14 = arith.extui %13 : i1 to i32
    %c0_i32_13 = arith.constant 0 : i32
    %15 = arith.cmpi ne, %14, %c0_i32_13 : i32
    scf.if %15 {
      %c0_14 = arith.constant 0 : index
      %c0_15 = arith.constant 0 : index
      %16 = vector.load %arg5[%c0_14, %c0_15] : memref<1x32xf32, #tpu.memory_space<vmem>>, vector<1x32xf32>
      %cst_16 = arith.constant 8.000000e+00 : f32
      %17 = vector.broadcast %cst_16 : f32 to vector<1x32xf32>
      %18 = arith.divf %16, %17 : vector<1x32xf32>
      %c0_17 = arith.constant 0 : index
      %c0_18 = arith.constant 0 : index
      %19 = vector.load %arg6[%c0_17, %c0_18] : memref<1x32xf32, #tpu.memory_space<vmem>>, vector<1x32xf32>
      %cst_19 = arith.constant 8.000000e+00 : f32
      %20 = vector.broadcast %cst_19 : f32 to vector<1x32xf32>
      %21 = arith.mulf %20, %18 : vector<1x32xf32>
      %22 = arith.mulf %21, %18 : vector<1x32xf32>
      %23 = arith.subf %19, %22 : vector<1x32xf32>
      %cst_20 = arith.constant 1.000000e-10 : f32
      %24 = vector.broadcast %cst_20 : f32 to vector<1x32xf32>
      %25 = arith.maximumf %23, %24 : vector<1x32xf32>
      %cst_21 = arith.constant 8.000000e+00 : f32
      %26 = vector.broadcast %cst_21 : f32 to vector<1x32xf32>
      %27 = arith.divf %25, %26 : vector<1x32xf32>
      %28 = math.sqrt %27 : vector<1x32xf32>
      %29 = vector.shape_cast %18 : vector<1x32xf32> to vector<1x1x32xf32>
      %30 = vector.shape_cast %28 : vector<1x32xf32> to vector<1x1x32xf32>
      %31 = tpu.concatenate %29, %30 in 1 : vector<1x1x32xf32>, vector<1x1x32xf32> -> vector<1x2x32xf32>
      %c0_22 = arith.constant 0 : index
      %c0_23 = arith.constant 0 : index
      %c0_24 = arith.constant 0 : index
      %32 = vector.load %arg4[%c0_22, %c0_23, %c0_24] : memref<1x2x32xf32, #tpu.memory_space<vmem>>, vector<1x2x32xf32>
      tpu.vector_store %arg4[%c0_22, %c0_23, %c0_24], %31 {strides = array<i32>} : memref<1x2x32xf32, #tpu.memory_space<vmem>>, vector<1x2x32xf32>,
    } else {
    }
    return
  }
  func.func @transform_0(%arg0: i32, %arg1: i32, %arg2: i32) -> (i32, i32, i32) {
    %c0_i32 = arith.constant 0 : i32
    return %arg0, %arg2, %arg1 : i32, i32, i32
  }
  func.func @transform_1(%arg0: i32, %arg1: i32, %arg2: i32) -> (i32, i32, i32) {
    %c0_i32 = arith.constant 0 : i32
    %c0_i32_0 = arith.constant 0 : i32
    return %arg0, %c0_i32, %arg1 : i32, i32, i32
  }
}

</mosaic_0001>

<llo_original>
// kernel: tpu_custom_call.1
$region0: #{tpu_custom_call.1}
  #allocation0 [shape = 'u32[]', space=smem, size = 0x4, offset = 0x4, fixed_abs, tag = 'smem constant byte address 0x4 - core index']
  #allocation1 [shape = 'u32[144,128]{1,0:T(1,128)}', space=vmem, size = 0x12000, scoped, tag = 'internal scratch']
  #allocation2 [shape = 'f32[1,32]{1,0:T(1,128)}', space=vmem, size = 0x200, scoped, tag = 'scratch operand']
  #allocation3 [shape = 'f32[1,32]{1,0:T(1,128)}', space=vmem, size = 0x200, scoped, tag = 'scratch operand']
  %s0 = inlined_call_operand.hbm [shape: f32[2,8,32], index: 0, kind: input, shape index: {}]
  %s1 = inlined_call_operand.hbm [shape: f32[2,2,32], index: 1, kind: output, shape index: {}]
  %s2 = sld [smem:[#allocation0]]
  $region49: #{tpu_custom_call.1} parent=0
    _
  %s4 = ssub.s32 1, %s2
  %s5 = scalar_select 0, %s4, %s2
  $region1: #{tpu_custom_call.1} parent=0
    #allocation4 [shape = 'u8[8192]{0}', space=vmem, size = 0x2000, scoped, tag = 'input window, operand 0']
    #allocation5 [shape = 's32[2]{0}', space=sflag, size = 0x8, scoped, tag = 'scoped memory for tpu_custom_call.1']
    #allocation6 [shape = 's32[2]{0}', space=sflag, size = 0x8, scoped, tag = 'scoped memory for tpu_custom_call.1']
    #allocation7 [shape = 'u8[2048]{0}', space=vmem, size = 0x800, scoped, tag = 'output window, operand 0']
    %6 = vsyncpa [#allocation5], 0
    %s7 = scalar_lea.sflag [#allocation5], 1
    %8 = vsyncpa %s7, 0
    %9 = vsyncpa [#allocation6], 0
    %s10 = scalar_lea.sflag [#allocation6], 1
    %11 = vsyncpa %s10, 0
    loop: start=0, step=1, limit=4
    $region2: #{tpu_custom_call.1} parent=1 // loop_pre_header
      _
    $region3: #{tpu_custom_call.1} parent=1 // loop_header
      %s13 = sphi 0, %s17
      %p14 = scmp.ge.s32.totalorder %s13, 4
      %s20 = sphi 0, %s39
      %s21 = sphi 0, %s35
      %s22 = sphi 0, %s31
      %s23 = sphi 0, %s20
      %s24 = sphi 0, %s21
      %s25 = sphi 0, %s22
      %s26 = sphi 0, %s23
      %s27 = sphi 0, %s24
      %s28 = sphi 0, %s25
      %s46 = sphi 0, %s48
      %s49 = sphi 0, %s46
      %s50 = sphi 0, %s49
      %s66 = sphi 0, %s50
      %s74 = sphi 0, %s76
      %s77 = sphi 0, %s74
      %s78 = sphi 0, %s77
      %s94 = sphi 0, %s78
    $region4: #{tpu_custom_call.1} parent=1 // loop_header_branch
      %16 = sbr.rel (%p14) target = $region8
    $region5: #{tpu_custom_call.1} parent=1 // loop_body
      %s18 = ssub.s32 %s13, 1
      %s19 = ssub.s32 %s13, 2
      %s29 = sadd.s32 1, %s22
      %p30 = scmp.ge.s32.totalorder %s29, 1
      %s31 = scalar_select %p30, 0, %s29
      %s32 = sadd.s32 1, %s21
      %s33 = scalar_select %p30, %s32, %s21
      %p34 = scmp.ge.s32.totalorder %s33, 1
      %s35 = scalar_select %p34, 0, %s33
      %s36 = sadd.s32 1, %s20
      %s37 = scalar_select %p34, %s36, %s20
      %p38 = scmp.ge.s32.totalorder %s37, 2
      %s39 = scalar_select %p38, 0, %s37
      %s40 = ssub.s32 %s20, %s39
      %s41 = ssub.s32 %s22, %s31
      %s42 = sor.u32 %s40, %s41
      %s43 = ssub.s32 %s21, %s35
      %s44 = sor.u32 %s42, %s43
      %p45 = scmp.eq.s32.totalorder %s44, 0
      %s47 = sadd.s32 %s46, 1
      %s48 = scalar_select %p45, %s46, %s47
      %p51 = pneg %p45
      %p52 = scmp.eq.s32.totalorder %s13, 1
      %p53 = por %p51, %p52
      %p54 = scmp.ne.s32.totalorder %s46, %s49
      %p55 = scmp.eq.s32.totalorder %s13, 0
      %p56 = por %p54, %p55
      %p57 = scmp.ne.s32.totalorder %s46, %s49
      %p58 = scmp.eq.s32.totalorder %s18, 1
      %p59 = por %p57, %p58
      %p60 = scmp.ne.s32.totalorder %s49, %s50
      %p61 = scmp.eq.s32.totalorder %s18, 0
      %p62 = por %p60, %p61
      %p63 = scmp.ne.s32.totalorder %s49, %s50
      %p64 = scmp.eq.s32.totalorder %s19, 1
      %p65 = por %p63, %p64
      %p67 = scmp.ne.s32.totalorder %s50, %s66
      %p68 = scmp.eq.s32.totalorder %s19, 0
      %p69 = por %p67, %p68
      %s70 = ssub.s32 %s20, %s39
      %s71 = ssub.s32 %s21, %s35
      %s72 = sor.u32 %s70, %s71
      %p73 = scmp.eq.s32.totalorder %s72, 0
      %s75 = sadd.s32 %s74, 1
      %s76 = scalar_select %p73, %s74, %s75
      %p79 = pneg %p73
      %p80 = scmp.eq.s32.totalorder %s13, 1
      %p81 = por %p79, %p80
      %p82 = scmp.ne.s32.totalorder %s74, %s77
      %p83 = scmp.eq.s32.totalorder %s13, 0
      %p84 = por %p82, %p83
      %p85 = scmp.ne.s32.totalorder %s74, %s77
      %p86 = scmp.eq.s32.totalorder %s18, 1
      %p87 = por %p85, %p86
      %p88 = scmp.ne.s32.totalorder %s77, %s78
      %p89 = scmp.eq.s32.totalorder %s18, 0
      %p90 = por %p88, %p89
      %p91 = scmp.ne.s32.totalorder %s77, %s78
      %p92 = scmp.eq.s32.totalorder %s19, 1
      %p93 = por %p91, %p92
      %p95 = scmp.ne.s32.totalorder %s78, %s94
      %p96 = scmp.eq.s32.totalorder %s19, 0
      %p97 = por %p95, %p96
      %p98 = scmp.le.s32.totalorder 1, %s13
      %p99 = scmp.lt.s32.totalorder %s13, 3
      %p100 = pnand %p98, %p99
      %p101 = pneg %p100
      // Predicated region
      $region9: #{tpu_custom_call.1} parent=5 // pred_check
        _
      $region10: #{tpu_custom_call.1} parent=5 // pred_check_branch
        %103 = sbr.rel (%p100) target = $region12
      $region11: #{tpu_custom_call.1} parent=5 // pred_region
        %s104 = ssub.s32 %s13, 1
      $region12: #{tpu_custom_call.1} parent=5 // pred_fallthru
        _
      %p105 = scmp.lt.s32.totalorder %s13, 2
      // Predicated region
      $region13: #{tpu_custom_call.1} parent=5 // pred_check
        %p106 = pneg %p105
      $region14: #{tpu_custom_call.1} parent=5 // pred_check_branch
        %108 = sbr.rel (%p106) target = $region16
      $region15: #{tpu_custom_call.1} parent=5 // pred_region
        // Predicated region
        $region17: #{tpu_custom_call.1} parent=15 // pred_check
          %p109 = pneg %p56
        $region18: #{tpu_custom_call.1} parent=15 // pred_check_branch
          %111 = sbr.rel (%p109) target = $region20
        $region19: #{tpu_custom_call.1} parent=15 // pred_region
          %s112 = sand.u32 %s46, 1
          %s113 = scalar_lea.sflag [#allocation5], %s112
          %s114 = sand.u32 %s46, 1
          %s115 = smul.addr %s114, 8
          %s116 = scalar_lea.vmem [#allocation4], %s115
          %s118 = ssub.s32 128, 128
          %119 = vsyncadd %s113, %s118
          %s120 = sadd.s32 %s21, %s22
          %s121 = sadd.s32 %s120, %s20
          %s122 = smul.addr %s121, 128
          %s123 = scalar_lea.hbm %s0, %s122
          %s125 = sshll.u32 %s116, 4
          %s126 = int_to_ptr.vmem [resolvable:$true] %s125
          %128 = dma.hbm_to_vmem [thread:$0]  %s123, 128, %s126, %s113
        $region20: #{tpu_custom_call.1} parent=15 // pred_fallthru
          _
      $region16: #{tpu_custom_call.1} parent=5 // pred_fallthru
        _
      %p129 = scmp.le.s32.totalorder 1, %s13
      %p130 = scmp.lt.s32.totalorder %s13, 3
      %p131 = pnand %p129, %p130
      %p132 = pneg %p131
      // Predicated region
      $region21: #{tpu_custom_call.1} parent=5 // pred_check
        _
      $region22: #{tpu_custom_call.1} parent=5 // pred_check_branch
        %134 = sbr.rel (%p131) target = $region24
      $region23: #{tpu_custom_call.1} parent=5 // pred_region
        %s135 = ssub.s32 %s13, 1
        %s136 = sand.u32 %s49, 1
        %s137 = scalar_lea.sflag [#allocation5], %s136
        %s138 = sand.u32 %s49, 1
        %s139 = smul.addr %s138, 8
        %s140 = scalar_lea.vmem [#allocation4], %s139
        // Predicated region
        $region25: #{tpu_custom_call.1} parent=23 // pred_check
          %p141 = pneg %p62
        $region26: #{tpu_custom_call.1} parent=23 // pred_check_branch
          %143 = sbr.rel (%p141) target = $region28
        $region27: #{tpu_custom_call.1} parent=23 // pred_region
          %144 = dma.done %s137, 128
        $region28: #{tpu_custom_call.1} parent=23 // pred_fallthru
          _
        %s145 = sand.u32 %s49, 1
        %s146 = scalar_lea.sflag [#allocation5], %s145
        %s147 = sand.u32 %s49, 1
        %s148 = smul.addr %s147, 8
        %s149 = scalar_lea.vmem [#allocation4], %s148
        %p150 = pneg %p62
        %p151 = pneg %p59
        %p152 = pneg %p90
        %p153 = pneg %p87
        %s154 = sand.u32 %s77, 1
        %s155 = scalar_lea.sflag [#allocation6], %s154
        %s156 = sand.u32 %s77, 1
        %s157 = smul.addr %s156, 2
        %s158 = scalar_lea.vmem [#allocation7], %s157
        %p159 = scmp.eq.s32.totalorder %s25, 0
        // Predicated region
        $region29: #{tpu_custom_call.1} parent=23 // pred_check
          %p160 = pneg %p159
        $region30: #{tpu_custom_call.1} parent=23 // pred_check_branch
          %162 = sbr.rel (%p160) target = $region32
        $region31: #{tpu_custom_call.1} parent=23 // pred_region
          %vm163 = vcmask 253952
          %164 = vst.msk [vmem:[#allocation2] sm:$0x1] %vm163, 0.0
          %165 = vst.msk [vmem:[#allocation3] sm:$0x1] %vm163, 0.0
        $region32: #{tpu_custom_call.1} parent=23 // pred_fallthru
          _
        %v166 = vld [vmem:[%s140] sm:$0xff]
        %v167 = vld [vmem:[#allocation2] sm:$0x1]
        %vm168 = vcmask 261120
        %v169 = vsel %vm168, %v166, 0.0
        %v170 = vrot.slane %v169, 4
        %v171 = vadd.f32 %v169, %v170
        %v172 = vrot.slane %v171, 2
        %v173 = vadd.f32 %v171, %v172
        %v174 = vrot.slane %v173, 1
        %v175 = vadd.f32 %v173, %v174
        %v176 = vadd.f32 %v167, %v175
        %vm177 = vcmask 253952
        %178 = vst.msk [vmem:[#allocation2] sm:$0x1] %vm177, %v176
        %v179 = vld [vmem:[#allocation3] sm:$0x1]
        %v180 = vmul.f32 %v166, %v166
        %v181 = vsel %vm168, %v180, 0.0
        %v182 = vrot.slane %v181, 4
        %v183 = vadd.f32 %v181, %v182
        %v184 = vrot.slane %v183, 2
        %v185 = vadd.f32 %v183, %v184
        %v186 = vrot.slane %v185, 1
        %v187 = vadd.f32 %v185, %v186
        %v188 = vadd.f32 %v179, %v187
        %189 = vst.msk [vmem:[#allocation3] sm:$0x1] %vm177, %v188
        // Predicated region
        $region33: #{tpu_custom_call.1} parent=23 // pred_check
          %p190 = pneg %p159
        $region34: #{tpu_custom_call.1} parent=23 // pred_check_branch
          %192 = sbr.rel (%p190) target = $region36
        $region35: #{tpu_custom_call.1} parent=23 // pred_region
          %v193 = vld [vmem:[#allocation2] sm:$0x1]
          %v194 = vrcp.pop 8.0
          %v195 = vmul.f32 %v193, %v194
          %v196 = vld [vmem:[#allocation3] sm:$0x1]
          %v197 = vmul.f32 %v195, 8.0
          %v198 = vmul.f32 %v197, %v195
          %v199 = vsub.f32 %v196, %v198
          %v200 = vmax.f32 %v199, 1e-10
          %v201 = vmul.f32 %v200, %v194
          %v202 = vrsqrt.pop %v201
          %v203 = vmul.f32 %v201, %v202
          %vm204 = vcmp.eq.f32.partialorder %v201, inf
          %v205 = vsel %vm204, %v201, %v203
          %vm206 = vcmp.eq.f32.partialorder %v201, 0.0
          %v207 = vand.u32 %v201, 2147483648
          %v208 = vsel %vm206, %v207, %v205
          %v210 = vlaneseq
          %v211 = vshrl.u32 %v210, 7
          %v212 = vsub.s32 0, %v211
          %v213 = vrot.slane %v208, %v212
          %vm215 = vcmask 1040384
          %v216 = vsel %vm215, %v195, %v213
          %vm217 = vcmask 254976
          %218 = vst.msk [vmem:[%s158] sm:$0x3] %vm217, %v216
        $region36: #{tpu_custom_call.1} parent=23 // pred_fallthru
          _
        %s219 = sand.u32 %s77, 1
        %s220 = scalar_lea.sflag [#allocation6], %s219
        %s221 = sand.u32 %s77, 1
        %s222 = smul.addr %s221, 2
        %s223 = scalar_lea.vmem [#allocation7], %s222
        // Predicated region
        $region37: #{tpu_custom_call.1} parent=23 // pred_check
          %p224 = pneg %p87
        $region38: #{tpu_custom_call.1} parent=23 // pred_check_branch
          %226 = sbr.rel (%p224) target = $region40
        $region39: #{tpu_custom_call.1} parent=23 // pred_region
          %s228 = ssub.s32 32, 32
          %229 = vsyncadd %s220, %s228
          %s230 = sadd.s32 %s24, %s23
          %s231 = smul.addr %s230, 32
          %s232 = scalar_lea.hbm %s1, %s231
          %s234 = sshll.u32 %s223, 4
          %s235 = int_to_ptr.vmem [resolvable:$true] %s234
          %237 = dma.vmem_to_hbm [thread:$0]  %s235, 32, %s232, %s220
        $region40: #{tpu_custom_call.1} parent=23 // pred_fallthru
          _
      $region24: #{tpu_custom_call.1} parent=5 // pred_fallthru
        _
      %p238 = scmp.le.s32.totalorder 2, %s13
      // Predicated region
      $region41: #{tpu_custom_call.1} parent=5 // pred_check
        %p239 = pneg %p238
      $region42: #{tpu_custom_call.1} parent=5 // pred_check_branch
        %241 = sbr.rel (%p239) target = $region44
      $region43: #{tpu_custom_call.1} parent=5 // pred_region
        %s242 = ssub.s32 %s13, 2
        // Predicated region
        $region45: #{tpu_custom_call.1} parent=43 // pred_check
          %p243 = pneg %p93
        $region46: #{tpu_custom_call.1} parent=43 // pred_check_branch
          %245 = sbr.rel (%p243) target = $region48
        $region47: #{tpu_custom_call.1} parent=43 // pred_region
          %s246 = sand.u32 %s78, 1
          %s247 = scalar_lea.sflag [#allocation6], %s246
          %s248 = sand.u32 %s78, 1
          %s249 = smul.addr %s248, 2
          %s250 = scalar_lea.vmem [#allocation7], %s249
          %251 = dma.done %s247, 32
        $region48: #{tpu_custom_call.1} parent=43 // pred_fallthru
          _
      $region44: #{tpu_custom_call.1} parent=5 // pred_fallthru
        _
    $region6: #{tpu_custom_call.1} parent=1 // loop_footer
      %s17 = sadd.s32 1, %s13
    $region7: #{tpu_custom_call.1} parent=1 // loop_footer_branch
      %12 = sbr.rel target = $region3
    $region8: #{tpu_custom_call.1} parent=1 // loop_exit
      _
    %252 = vsyncpa [#allocation5], 1
    %s253 = scalar_lea.sflag [#allocation5], 1
    %254 = vsyncpa %s253, 1
    %255 = vsyncpa [#allocation6], 1
    %s256 = scalar_lea.sflag [#allocation6], 1
    %257 = vsyncpa %s256, 1

</llo_original>
